<compile_context>
chip_gen: v5e
topology: v5e:2x2
jax: 0.10.0
libtpu: 0.0.40
codegen_flags: <defaults>
</compile_context>

<pallas_src>
import jax
import jax.numpy as jnp
from jax.experimental import pallas as pl
from jax.experimental.pallas import tpu as pltpu  # noqa: F401  (TPU backend)

batch_size = 1
hidden_size = 4
input_size = 4


def rnncell_kernel(xh_ref, w_ref, b_ref, out_ref):
    # xh_ref: (B, I+H)   concatenated [x, h]
    # w_ref:  (I+H, H)   stacked [W_ih^T ; W_hh^T]
    # b_ref:  (1, H)     fused bias (b_ih + b_hh)
    pre = jnp.dot(xh_ref[...], w_ref[...], preferred_element_type=jnp.float32)
    out_ref[...] = jnp.tanh(pre + b_ref[...]).astype(out_ref.dtype)


def prepare_rnncell_params(w_ih, w_hh, b_ih, b_hh):
    """One-time parameter prep (call OUTSIDE any step loop).

    w_ih: (H, I), w_hh: (H, H), b_ih/b_hh: (H,)
    Returns:
      w_fused: (I+H, H)  = [W_ih^T ; W_hh^T]
      b_fused: (1, H)    = b_ih + b_hh
    """
    H = w_ih.shape[0]
    w_fused = jnp.concatenate([w_ih.T, w_hh.T], axis=0)
    b_fused = (b_ih + b_hh).reshape(1, H)
    return w_fused, b_fused


def rnncell_forward(x, h, w_fused, b_fused):
    """x: (B, I), h: (B, H), w_fused: (I+H, H), b_fused: (1, H) -> (B, H)."""
    B, I = x.shape
    H = h.shape[1]
    IH = I + H
    assert w_fused.shape == (IH, H)
    assert b_fused.shape == (1, H)

    xh = jnp.concatenate([x, h], axis=1)  # (B, I+H)

    full = lambda shape: pl.BlockSpec(shape, lambda: tuple(0 for _ in shape))
    dt_bytes = jnp.dtype(x.dtype).itemsize
    cost = pl.CostEstimate(
        flops=2 * B * IH * H + B * H,          # fused matmul + bias add
        transcendentals=B * H,                  # tanh
        bytes_accessed=dt_bytes * (B * IH + IH * H + H + B * H),
    )
    return pl.pallas_call(
        rnncell_kernel,
        out_shape=jax.ShapeDtypeStruct((B, H), x.dtype),
        grid=(),
        in_specs=[
            full((B, IH)),
            full((IH, H)),
            full((1, H)),
        ],
        out_specs=full((B, H)),
        cost_estimate=cost,
    )(xh, w_fused, b_fused)


if __name__ == "__main__":
    key = jax.random.PRNGKey(0)
    k_x, k_h, k_wih, k_whh, k_bih, k_bhh = jax.random.split(key, 6)

    # Deterministic parameter init mirroring PyTorch's U(-1/sqrt(H), 1/sqrt(H)).
    bound = 1.0 / jnp.sqrt(jnp.float32(hidden_size))
    w_ih = jax.random.uniform(k_wih, (hidden_size, input_size), jnp.float32, -bound, bound)
    w_hh = jax.random.uniform(k_whh, (hidden_size, hidden_size), jnp.float32, -bound, bound)
    b_ih = jax.random.uniform(k_bih, (hidden_size,), jnp.float32, -bound, bound)
    b_hh = jax.random.uniform(k_bhh, (hidden_size,), jnp.float32, -bound, bound)

    x = jax.random.normal(k_x, (batch_size, input_size), jnp.float32)
    h0 = jnp.zeros((batch_size, hidden_size), jnp.float32)  # Model.init_hidden()

    # One-time parameter prep (outside any step loop).
    w_fused, b_fused = prepare_rnncell_params(w_ih, w_hh, b_ih, b_hh)

    h1 = rnncell_forward(x, h0, w_fused, b_fused)
    jax.block_until_ready(h1)

    # Reference check in plain JAX (original un-fused formulation).
    ref = jnp.tanh(x @ w_ih.T + b_ih + h0 @ w_hh.T + b_hh)
    assert jnp.allclose(h1, ref, atol=1e-5, rtol=1e-5), "mismatch vs reference"

    print("KERNEL_OK")
</pallas_src>

<mosaic_0001>
module attributes {stable_mosaic.version = 11 : i64} {
  func.func @rnncell_kernel(%arg0: memref<1x8xf32, #tpu.memory_space<vmem>>, %arg1: memref<8x4xf32, #tpu.memory_space<vmem>>, %arg2: memref<1x4xf32, #tpu.memory_space<vmem>>, %arg3: memref<1x4xf32, #tpu.memory_space<vmem>>) attributes {dimension_semantics = [], scalar_prefetch = 0 : i64, scratch_operands = 0 : i64, tpu.core_type = #tpu.core_type<tc>} {
    %c0 = arith.constant 0 : index
    %c0_0 = arith.constant 0 : index
    %0 = vector.load %arg0[%c0, %c0_0] : memref<1x8xf32, #tpu.memory_space<vmem>>, vector<1x8xf32>
    %c0_1 = arith.constant 0 : index
    %c0_2 = arith.constant 0 : index
    %1 = vector.load %arg1[%c0_1, %c0_2] : memref<8x4xf32, #tpu.memory_space<vmem>>, vector<8x4xf32>
    %cst = arith.constant dense<0.000000e+00> : vector<1x4xf32>
    %2 = tpu.matmul %0, %1, %cst {dimension_numbers = #tpu.dot_dimension_numbers<[1], [0], [0], [1], [0, 0, 1, 1], [], []>} : vector<1x8xf32>, vector<8x4xf32>, vector<1x4xf32> -> vector<1x4xf32>
    %c0_3 = arith.constant 0 : index
    %c0_4 = arith.constant 0 : index
    %3 = vector.load %arg2[%c0_3, %c0_4] : memref<1x4xf32, #tpu.memory_space<vmem>>, vector<1x4xf32>
    %4 = arith.addf %2, %3 : vector<1x4xf32>
    %5 = math.tanh %4 : vector<1x4xf32>
    %c0_5 = arith.constant 0 : index
    %c0_6 = arith.constant 0 : index
    %6 = vector.load %arg3[%c0_5, %c0_6] : memref<1x4xf32, #tpu.memory_space<vmem>>, vector<1x4xf32>
    tpu.vector_store %arg3[%c0_5, %c0_6], %5 {strides = array<i32>} : memref<1x4xf32, #tpu.memory_space<vmem>>, vector<1x4xf32>,
    return
  }
}

</mosaic_0001>

<llo_original>
// kernel: tpu_custom_call.1
$region0: #{tpu_custom_call.1}
  #allocation0 [shape = 'u32[]', space=smem, size = 0x4, offset = 0x4, fixed_abs, tag = 'smem constant byte address 0x4 - core index']
  #allocation1 [shape = 'u32[72,128]{1,0:T(1,128)}', space=vmem, size = 0x9000, scoped, tag = 'internal scratch']
  %s0 = inlined_call_operand.vmem [shape: f32[1,8], index: 0, kind: input, shape index: {}]
  %s1 = inlined_call_operand.vmem [shape: f32[8,4], index: 1, kind: input, shape index: {}]
  %s2 = inlined_call_operand.vmem [shape: f32[1,4], index: 2, kind: input, shape index: {}]
  %s3 = inlined_call_operand.hbm [shape: f32[1,4], index: 3, kind: output, shape index: {}]
  %s4 = sld [smem:[#allocation0]]
  $region22: #{tpu_custom_call.1} parent=0
    _
  %s6 = ssub.s32 1, %s4
  %s7 = scalar_select 0, %s6, %s4
  $region1: #{tpu_custom_call.1} parent=0
    #allocation2 [shape = 'u8[512]{0}', space=vmem, size = 0x400, scoped, tag = 'output window, operand 0, single buffered']
    #allocation3 [shape = 's32[1]{0}', space=sflag, size = 0x4, scoped, tag = 'scoped memory for tpu_custom_call.1']
    %8 = vsyncpa [#allocation3], 0
    // Predicated region
    $region2: #{tpu_custom_call.1} parent=1 // pred_check
      _
    $region3: #{tpu_custom_call.1} parent=1 // pred_check_branch
      %10 = sbr.rel (0) target = $region5
    $region4: #{tpu_custom_call.1} parent=1 // pred_region
      _
    $region5: #{tpu_custom_call.1} parent=1 // pred_fallthru
      _
    // Predicated region
    $region6: #{tpu_custom_call.1} parent=1 // pred_check
      _
    $region7: #{tpu_custom_call.1} parent=1 // pred_check_branch
      %12 = sbr.rel (0) target = $region9
    $region8: #{tpu_custom_call.1} parent=1 // pred_region
      _
    $region9: #{tpu_custom_call.1} parent=1 // pred_fallthru
      _
    // Predicated region
    $region10: #{tpu_custom_call.1} parent=1 // pred_check
      _
    $region11: #{tpu_custom_call.1} parent=1 // pred_check_branch
      %14 = sbr.rel (0) target = $region13
    $region12: #{tpu_custom_call.1} parent=1 // pred_region
      _
    $region13: #{tpu_custom_call.1} parent=1 // pred_fallthru
      _
    %v15 = vld [vmem:[%s0] sm:$0x1]
    %v16 = vld [vmem:[%s1] sm:$0xff]
    %v17 = vld [vmem:[%s2] sm:$0x1]
    %vm18 = vcmask 64512
    %v20 = vsel %vm18, %v15, 0
    %22 = vmatpush.msra.mxu0 0.0
    %23 = vmatpush.msra.mxu0 0.0
    %24 = vmatpush.msra.mxu0 0.0
    %25 = vmatpush.msra.mxu0 0.0
    %26 = vmatpush.msra.mxu0 0.0
    %27 = vmatpush.msra.mxu0 0.0
    %28 = vmatpush.msra.mxu0 0.0
    %29 = vmatpush.msra.mxu0 0.0
    %30 = vmatpush.msra.mxu0 0.0
    %31 = vmatpush.msra.mxu0 0.0
    %32 = vmatpush.msra.mxu0 0.0
    %33 = vmatpush.msra.mxu0 0.0
    %34 = vmatpush.msra.mxu0 0.0
    %35 = vmatpush.msra.mxu0 0.0
    %36 = vmatpush.msra.mxu0 0.0
    %37 = vmatpush.msra.mxu0 %v16
    %38 = vmatmul.f32.gmra.mxu0 %v20
    %v39 = vpop.f32.mrf.mxu0
    %v40 = vadd.f32 %v17, %v39
    %41 = vdwg.mxu0
    %v42 = vtanh.pop %v40
    %vm43 = vcmask 24576
    %44 = vst.msk [vmem:[#allocation2] sm:$0x1] %vm43, %v42
    // Predicated region
    $region14: #{tpu_custom_call.1} parent=1 // pred_check
      _
    $region15: #{tpu_custom_call.1} parent=1 // pred_check_branch
      %46 = sbr.rel (0) target = $region17
    $region16: #{tpu_custom_call.1} parent=1 // pred_region
      %48 = vsyncadd [#allocation3], 0
      %s50 = sshll.u32 [#allocation2], 4
      %s51 = int_to_ptr.vmem [resolvable:$true] %s50
      %s52 = sshll.u32 %s3, 4
      %s53 = int_to_ptr.hbm [resolvable:$true] %s52
      %55 = dma.vmem_to_hbm [thread:$0]  %s51, 16, %s53, [#allocation3]
    $region17: #{tpu_custom_call.1} parent=1 // pred_fallthru
      _
    // Predicated region
    $region18: #{tpu_custom_call.1} parent=1 // pred_check
      _
    $region19: #{tpu_custom_call.1} parent=1 // pred_check_branch
      %57 = sbr.rel (0) target = $region21
    $region20: #{tpu_custom_call.1} parent=1 // pred_region
      %59 = dma.done [#allocation3], 16
    $region21: #{tpu_custom_call.1} parent=1 // pred_fallthru
      _
    %60 = vsyncpa [#allocation3], 1

</llo_original>
